<compile_context>
chip_gen: v7x
topology: tpu7x:2x2x1
jax: 0.10.0
libtpu: 0.0.40
codegen_flags: <defaults>
</compile_context>

<pallas_src>
import functools

import jax
import jax.numpy as jnp
from jax import lax
from jax.experimental import pallas as pl
from jax.experimental.pallas import tpu as pltpu

_LANES = 128


def _round_up(n, m):
    return ((n + m - 1) // m) * m


# ----------------------------------------------------------------------------
# Fused Pallas kernel: v = x; for each layer: v = act(v @ W + b); o_ref = v
# ----------------------------------------------------------------------------
def _fused_forward_kernel(x_ref, *refs, relu_flags):
    o_ref = refs[-1]
    wb_refs = refs[:-1]
    v = x_ref[...]                                        # (1, K0_pad) f32
    for li, relu in enumerate(relu_flags):
        w = wb_refs[2 * li][...]                          # (K_pad, N_pad)
        b = wb_refs[2 * li + 1][...]                      # (1, N_pad)
        v = jnp.dot(v, w, preferred_element_type=jnp.float32) + b
        if relu:
            v = jnp.maximum(v, 0.0)
    o_ref[...] = v.astype(o_ref.dtype)


def eval_model_forward(x, layers):
    """x: (1, C, H, W). layers: list of (W_pad (Kp,Np), b_pad (1,Np), relu, n_true)."""
    relu_flags = tuple(bool(l[2]) for l in layers)
    k0_pad = layers[0][0].shape[0]
    n_out_pad = layers[-1][0].shape[1]
    n_out_true = layers[-1][3]

    # x.view(-1) in the PyTorch module: NCHW flatten (batch must be 1).
    xflat = x.reshape(1, -1).astype(jnp.float32)
    assert xflat.shape[1] <= k0_pad, (xflat.shape, k0_pad)
    x_pad = jnp.pad(xflat, ((0, 0), (0, k0_pad - xflat.shape[1])))

    operands = [x_pad]
    for w, b, _, _ in layers:
        operands.append(w)
        operands.append(b)

    vmem = pl.BlockSpec(memory_space=pltpu.MemorySpace.VMEM)
    out = pl.pallas_call(
        functools.partial(_fused_forward_kernel, relu_flags=relu_flags),
        out_shape=jax.ShapeDtypeStruct((1, n_out_pad), jnp.float32),
        in_specs=[vmem] * len(operands),
        out_specs=vmem,
    )(*operands)
    return out[0, :n_out_true]                            # shape (1,), like PyTorch


# ----------------------------------------------------------------------------
# One-time lowering of Conv2d to an exact dense matrix (parameter-build time)
# ----------------------------------------------------------------------------
def _conv_as_dense(w, b, stride, padding, in_shape):
    """w: (Cout, Cin, kh, kw), b: (Cout,), in_shape: (Cin, H, W).

    Returns (M, b_vec, out_shape) with flatten_NCHW(conv(x)) = flatten_NCHW(x) @ M + b_vec.
    Built by applying the conv to the identity basis (exact, one-time cost)."""
    Cout, Cin, kh, kw = w.shape
    C, H, W = in_shape
    assert C == Cin, (C, Cin)
    n_in = Cin * H * W
    basis = jnp.eye(n_in, dtype=jnp.float32).reshape(n_in, Cin, H, W)
    out = lax.conv_general_dilated(
        basis, w.astype(jnp.float32),
        window_strides=(stride, stride),
        padding=[(padding, padding), (padding, padding)],
        dimension_numbers=("NCHW", "OIHW", "NCHW"))
    _, Co, Ho, Wo = out.shape
    M = out.reshape(n_in, Co * Ho * Wo)                    # (flat_in, flat_out)
    b_vec = jnp.repeat(b.astype(jnp.float32), Ho * Wo)     # NCHW flatten order
    return M, b_vec, (Co, Ho, Wo)


# ----------------------------------------------------------------------------
# Deterministic parameter construction (synthetic, no checkpoint load)
# ----------------------------------------------------------------------------
def make_params(key, input_channels, conv_layer_cfg, fc_layer_sizes, in_hw=(7, 6)):
    h, w = in_hw
    in_shape = (input_channels, h, w)

    conv_params = []          # raw (W, b, stride, padding) for the reference check
    raw_layers = []           # (W_dense (K, N), b (N,), relu)
    for (cin, cout, k, stride, padding) in conv_layer_cfg:
        assert cin == in_shape[0]
        key, k1, k2 = jax.random.split(key, 3)
        fan_in = cin * k * k
        W = jax.random.normal(k1, (cout, cin, k, k), jnp.float32) * (2.0 / fan_in) ** 0.5
        b = jax.random.normal(k2, (cout,), jnp.float32) * 0.01
        conv_params.append((W, b, stride, padding))
        M, bvec, out_shape = _conv_as_dense(W, b, stride, padding, in_shape)
        raw_layers.append((M, bvec, True))
        in_shape = out_shape
    flattened = in_shape[0] * in_shape[1] * in_shape[2]

    fc_params = []            # raw (W (out,in), b) for the reference check
    prev = flattened
    sizes = list(fc_layer_sizes) + [1]
    for idx, size in enumerate(sizes):
        key, k1, k2 = jax.random.split(key, 3)
        W = jax.random.normal(k1, (size, prev), jnp.float32) * (2.0 / prev) ** 0.5
        b = jax.random.normal(k2, (size,), jnp.float32) * 0.01
        fc_params.append((W, b))
        raw_layers.append((W.T, b, idx < len(sizes) - 1))  # transpose hoisted here
        prev = size

    # Zero-pad every chain width up to a multiple of 128 (lane-dense layout).
    layers = []
    for (Wd, bd, relu) in raw_layers:
        K, N = Wd.shape
        Kp, Np = _round_up(K, _LANES), _round_up(N, _LANES)
        Wp = jnp.zeros((Kp, Np), jnp.float32).at[:K, :N].set(Wd)
        bp = jnp.zeros((1, Np), jnp.float32).at[0, :N].set(bd)
        layers.append((Wp, bp, relu, N))
    return layers, conv_params, fc_params, flattened


# ----------------------------------------------------------------------------
# Pure-JAX reference (mirrors the PyTorch module) for a correctness check
# ----------------------------------------------------------------------------
def _reference_forward(x, conv_params, fc_params):
    for (W, b, stride, padding) in conv_params:
        x = lax.conv_general_dilated(
            x, W, window_strides=(stride, stride),
            padding=[(padding, padding), (padding, padding)],
            dimension_numbers=("NCHW", "OIHW", "NCHW"))
        x = jnp.maximum(x + b.reshape(1, -1, 1, 1), 0.0)
    v = x.reshape(-1)                                      # x.view(-1)
    for i, (W, b) in enumerate(fc_params):
        v = W @ v + b
        if i < len(fc_params) - 1:
            v = jnp.maximum(v, 0.0)
    return v


if __name__ == "__main__":
    import numpy as np

    key = jax.random.PRNGKey(0)

    # Small config consistent with the module (7x6 board, as in _get_flattened_size)
    input_channels = 2
    conv_layer_cfg = [
        # (in_channels, out_channels, kernel_size, stride, padding)
        (2, 4, 3, 1, 1),
        (4, 8, 3, 1, 1),
    ]
    fc_layer_sizes = [32, 16]

    key, pkey, xkey = jax.random.split(key, 3)
    layers, conv_params, fc_params, flattened = make_params(
        pkey, input_channels, conv_layer_cfg, fc_layer_sizes)

    # forward uses x.view(-1), so batch must be 1 (as in the PyTorch usage)
    x = jax.random.normal(xkey, (1, input_channels, 7, 6), jnp.float32)

    fwd = jax.jit(lambda inp: eval_model_forward(inp, layers))
    out = jax.block_until_ready(fwd(x))
    assert out.shape == (1,), out.shape

    ref = jax.block_until_ready(_reference_forward(x, conv_params, fc_params))
    np.testing.assert_allclose(np.asarray(out), np.asarray(ref), rtol=1e-3, atol=1e-3)

    print("KERNEL_OK")
</pallas_src>

<mosaic_0001>
module attributes {stable_mosaic.version = 11 : i64} {
  func.func @_fused_forward_kernel(%arg0: memref<1x128xf32, #tpu.memory_space<vmem>>, %arg1: memref<128x256xf32, #tpu.memory_space<vmem>>, %arg2: memref<1x256xf32, #tpu.memory_space<vmem>>, %arg3: memref<256x384xf32, #tpu.memory_space<vmem>>, %arg4: memref<1x384xf32, #tpu.memory_space<vmem>>, %arg5: memref<384x128xf32, #tpu.memory_space<vmem>>, %arg6: memref<1x128xf32, #tpu.memory_space<vmem>>, %arg7: memref<128x128xf32, #tpu.memory_space<vmem>>, %arg8: memref<1x128xf32, #tpu.memory_space<vmem>>, %arg9: memref<128x128xf32, #tpu.memory_space<vmem>>, %arg10: memref<1x128xf32, #tpu.memory_space<vmem>>, %arg11: memref<1x128xf32, #tpu.memory_space<vmem>>) attributes {dimension_semantics = [], scalar_prefetch = 0 : i64, scratch_operands = 0 : i64, tpu.core_type = #tpu.core_type<tc>} {
    %c0 = arith.constant 0 : index
    %c0_0 = arith.constant 0 : index
    %0 = vector.load %arg0[%c0, %c0_0] : memref<1x128xf32, #tpu.memory_space<vmem>>, vector<1x128xf32>
    %c0_1 = arith.constant 0 : index
    %c0_2 = arith.constant 0 : index
    %1 = vector.load %arg1[%c0_1, %c0_2] : memref<128x256xf32, #tpu.memory_space<vmem>>, vector<128x256xf32>
    %c0_3 = arith.constant 0 : index
    %c0_4 = arith.constant 0 : index
    %2 = vector.load %arg2[%c0_3, %c0_4] : memref<1x256xf32, #tpu.memory_space<vmem>>, vector<1x256xf32>
    %cst = arith.constant dense<0.000000e+00> : vector<1x256xf32>
    %3 = tpu.matmul %0, %1, %cst {dimension_numbers = #tpu.dot_dimension_numbers<[1], [0], [0], [1], [0, 0, 1, 1], [], []>} : vector<1x128xf32>, vector<128x256xf32>, vector<1x256xf32> -> vector<1x256xf32>
    %4 = arith.addf %3, %2 : vector<1x256xf32>
    %cst_5 = arith.constant 0.000000e+00 : f32
    %5 = vector.broadcast %cst_5 : f32 to vector<1x256xf32>
    %6 = arith.maximumf %4, %5 : vector<1x256xf32>
    %c0_6 = arith.constant 0 : index
    %c0_7 = arith.constant 0 : index
    %7 = vector.load %arg3[%c0_6, %c0_7] : memref<256x384xf32, #tpu.memory_space<vmem>>, vector<256x384xf32>
    %c0_8 = arith.constant 0 : index
    %c0_9 = arith.constant 0 : index
    %8 = vector.load %arg4[%c0_8, %c0_9] : memref<1x384xf32, #tpu.memory_space<vmem>>, vector<1x384xf32>
    %cst_10 = arith.constant dense<0.000000e+00> : vector<1x384xf32>
    %9 = tpu.matmul %6, %7, %cst_10 {dimension_numbers = #tpu.dot_dimension_numbers<[1], [0], [0], [1], [0, 0, 1, 1], [], []>} : vector<1x256xf32>, vector<256x384xf32>, vector<1x384xf32> -> vector<1x384xf32>
    %10 = arith.addf %9, %8 : vector<1x384xf32>
    %cst_11 = arith.constant 0.000000e+00 : f32
    %11 = vector.broadcast %cst_11 : f32 to vector<1x384xf32>
    %12 = arith.maximumf %10, %11 : vector<1x384xf32>
    %c0_12 = arith.constant 0 : index
    %c0_13 = arith.constant 0 : index
    %13 = vector.load %arg5[%c0_12, %c0_13] : memref<384x128xf32, #tpu.memory_space<vmem>>, vector<384x128xf32>
    %c0_14 = arith.constant 0 : index
    %c0_15 = arith.constant 0 : index
    %14 = vector.load %arg6[%c0_14, %c0_15] : memref<1x128xf32, #tpu.memory_space<vmem>>, vector<1x128xf32>
    %cst_16 = arith.constant dense<0.000000e+00> : vector<1x128xf32>
    %15 = tpu.matmul %12, %13, %cst_16 {dimension_numbers = #tpu.dot_dimension_numbers<[1], [0], [0], [1], [0, 0, 1, 1], [], []>} : vector<1x384xf32>, vector<384x128xf32>, vector<1x128xf32> -> vector<1x128xf32>
    %16 = arith.addf %15, %14 : vector<1x128xf32>
    %cst_17 = arith.constant 0.000000e+00 : f32
    %17 = vector.broadcast %cst_17 : f32 to vector<1x128xf32>
    %18 = arith.maximumf %16, %17 : vector<1x128xf32>
    %c0_18 = arith.constant 0 : index
    %c0_19 = arith.constant 0 : index
    %19 = vector.load %arg7[%c0_18, %c0_19] : memref<128x128xf32, #tpu.memory_space<vmem>>, vector<128x128xf32>
    %c0_20 = arith.constant 0 : index
    %c0_21 = arith.constant 0 : index
    %20 = vector.load %arg8[%c0_20, %c0_21] : memref<1x128xf32, #tpu.memory_space<vmem>>, vector<1x128xf32>
    %cst_22 = arith.constant dense<0.000000e+00> : vector<1x128xf32>
    %21 = tpu.matmul %18, %19, %cst_22 {dimension_numbers = #tpu.dot_dimension_numbers<[1], [0], [0], [1], [0, 0, 1, 1], [], []>} : vector<1x128xf32>, vector<128x128xf32>, vector<1x128xf32> -> vector<1x128xf32>
    %22 = arith.addf %21, %20 : vector<1x128xf32>
    %cst_23 = arith.constant 0.000000e+00 : f32
    %23 = vector.broadcast %cst_23 : f32 to vector<1x128xf32>
    %24 = arith.maximumf %22, %23 : vector<1x128xf32>
    %c0_24 = arith.constant 0 : index
    %c0_25 = arith.constant 0 : index
    %25 = vector.load %arg9[%c0_24, %c0_25] : memref<128x128xf32, #tpu.memory_space<vmem>>, vector<128x128xf32>
    %c0_26 = arith.constant 0 : index
    %c0_27 = arith.constant 0 : index
    %26 = vector.load %arg10[%c0_26, %c0_27] : memref<1x128xf32, #tpu.memory_space<vmem>>, vector<1x128xf32>
    %cst_28 = arith.constant dense<0.000000e+00> : vector<1x128xf32>
    %27 = tpu.matmul %24, %25, %cst_28 {dimension_numbers = #tpu.dot_dimension_numbers<[1], [0], [0], [1], [0, 0, 1, 1], [], []>} : vector<1x128xf32>, vector<128x128xf32>, vector<1x128xf32> -> vector<1x128xf32>
    %28 = arith.addf %27, %26 : vector<1x128xf32>
    %c0_29 = arith.constant 0 : index
    %c0_30 = arith.constant 0 : index
    %29 = vector.load %arg11[%c0_29, %c0_30] : memref<1x128xf32, #tpu.memory_space<vmem>>, vector<1x128xf32>
    tpu.vector_store %arg11[%c0_29, %c0_30], %28 {strides = array<i32>} : memref<1x128xf32, #tpu.memory_space<vmem>>, vector<1x128xf32>,
    return
  }
}

</mosaic_0001>

<llo_original>
// kernel: _lambda_.1
$region0: #{_lambda_.1}
  #allocation0 [shape = 'u32[]', space=smem, size = 0x4, offset = 0x4, fixed_abs, tag = 'smem constant byte address 0x4 - core index']
  #allocation1 [shape = 'u32[144,128]{1,0:T(1,128)}', space=vmem, size = 0x12000, scoped, tag = 'internal scratch']
  %s0 = inlined_call_operand.vmem [shape: f32[1,128], index: 0, kind: input, shape index: {}]
  %s1 = inlined_call_operand.hbm [shape: f32[128,256], index: 1, kind: input, shape index: {}]
  %s2 = inlined_call_operand.vmem [shape: f32[1,256], index: 2, kind: input, shape index: {}]
  %s3 = inlined_call_operand.hbm [shape: f32[256,384], index: 3, kind: input, shape index: {}]
  %s4 = inlined_call_operand.vmem [shape: f32[1,384], index: 4, kind: input, shape index: {}]
  %s5 = inlined_call_operand.hbm [shape: f32[384,128], index: 5, kind: input, shape index: {}]
  %s6 = inlined_call_operand.vmem [shape: f32[1,128], index: 6, kind: input, shape index: {}]
  %s7 = inlined_call_operand.hbm [shape: f32[128,128], index: 7, kind: input, shape index: {}]
  %s8 = inlined_call_operand.vmem [shape: f32[1,128], index: 8, kind: input, shape index: {}]
  %s9 = inlined_call_operand.hbm [shape: f32[128,128], index: 9, kind: input, shape index: {}]
  %s10 = inlined_call_operand.vmem [shape: f32[1,128], index: 10, kind: input, shape index: {}]
  %s11 = inlined_call_operand.hbm [shape: f32[1,128], index: 11, kind: output, shape index: {}]
  %s12 = sld [smem:[#allocation0]]
  $region74: #{_lambda_.1} parent=0
    _
  %s14 = ssub.s32 1, %s12
  %s15 = scalar_select 0, %s14, %s12
  $region1: #{_lambda_.1} parent=0
    #allocation2 [shape = 'u8[131072]{0}', space=vmem, size = 0x20000, scoped, tag = 'input window, operand 1, single buffered']
    #allocation3 [shape = 's32[1]{0}', space=sflag, size = 0x4, scoped, tag = 'scoped memory for _lambda_.1']
    #allocation4 [shape = 's32[1]{0}', space=sflag, size = 0x4, scoped, tag = 'scoped memory for _lambda_.1']
    #allocation5 [shape = 'u8[393216]{0}', space=vmem, size = 0x60000, scoped, tag = 'input window, operand 3, single buffered']
    #allocation6 [shape = 's32[1]{0}', space=sflag, size = 0x4, scoped, tag = 'scoped memory for _lambda_.1']
    #allocation7 [shape = 'u8[196608]{0}', space=vmem, size = 0x30000, scoped, tag = 'input window, operand 5, single buffered']
    #allocation8 [shape = 'u8[65536]{0}', space=vmem, size = 0x10000, scoped, tag = 'input window, operand 7, single buffered']
    #allocation9 [shape = 's32[1]{0}', space=sflag, size = 0x4, scoped, tag = 'scoped memory for _lambda_.1']
    #allocation10 [shape = 'u8[65536]{0}', space=vmem, size = 0x10000, scoped, tag = 'input window, operand 9, single buffered']
    #allocation11 [shape = 'u8[512]{0}', space=vmem, size = 0x400, scoped, tag = 'output window, operand 0, single buffered']
    %16 = vsyncpa [#allocation3], 0
    %17 = vsyncpa [#allocation6], 0
    %18 = vsyncpa [#allocation9], 0
    %19 = vsyncpa [#allocation4], 0
    // Predicated region
    $region2: #{_lambda_.1} parent=1 // pred_check
      _
    $region3: #{_lambda_.1} parent=1 // pred_check_branch
      %21 = sbr.rel (0) target = $region5
    $region4: #{_lambda_.1} parent=1 // pred_region
      _
    $region5: #{_lambda_.1} parent=1 // pred_fallthru
      _
    // Predicated region
    $region6: #{_lambda_.1} parent=1 // pred_check
      _
    $region7: #{_lambda_.1} parent=1 // pred_check_branch
      %23 = sbr.rel (0) target = $region9
    $region8: #{_lambda_.1} parent=1 // pred_region
      %s25 = ssub.s32 4096, 4096
      %26 = vsyncadd [#allocation3], %s25
      %s27 = sshll.u32 [#allocation2], 4
      %s28 = int_to_ptr.vmem [resolvable:$true] %s27
      %33 = dma.hbm_to_vmem [thread:$0]  %s1, 4096, %s28, [#allocation3], 256, 256, 16
    $region9: #{_lambda_.1} parent=1 // pred_fallthru
      _
    // Predicated region
    $region10: #{_lambda_.1} parent=1 // pred_check
      _
    $region11: #{_lambda_.1} parent=1 // pred_check_branch
      %35 = sbr.rel (0) target = $region13
    $region12: #{_lambda_.1} parent=1 // pred_region
      _
    $region13: #{_lambda_.1} parent=1 // pred_fallthru
      _
    // Predicated region
    $region14: #{_lambda_.1} parent=1 // pred_check
      _
    $region15: #{_lambda_.1} parent=1 // pred_check_branch
      %37 = sbr.rel (0) target = $region17
    $region16: #{_lambda_.1} parent=1 // pred_region
      %s39 = ssub.s32 12288, 12288
      %40 = vsyncadd [#allocation6], %s39
      %s41 = sshll.u32 [#allocation5], 4
      %s42 = int_to_ptr.vmem [resolvable:$true] %s41
      %47 = dma.hbm_to_vmem [thread:$0]  %s3, 12288, %s42, [#allocation6], 384, 384, 24
    $region17: #{_lambda_.1} parent=1 // pred_fallthru
      _
    // Predicated region
    $region18: #{_lambda_.1} parent=1 // pred_check
      _
    $region19: #{_lambda_.1} parent=1 // pred_check_branch
      %49 = sbr.rel (0) target = $region21
    $region20: #{_lambda_.1} parent=1 // pred_region
      _
    $region21: #{_lambda_.1} parent=1 // pred_fallthru
      _
    // Predicated region
    $region22: #{_lambda_.1} parent=1 // pred_check
      _
    $region23: #{_lambda_.1} parent=1 // pred_check_branch
      %51 = sbr.rel (0) target = $region25
    $region24: #{_lambda_.1} parent=1 // pred_region
      %s53 = ssub.s32 6144, 6144
      %54 = vsyncadd [#allocation6], %s53
      %s55 = sshll.u32 [#allocation7], 4
      %s56 = int_to_ptr.vmem [resolvable:$true] %s55
      %61 = dma.hbm_to_vmem [thread:$0]  %s5, 6144, %s56, [#allocation6], 128, 128, 8
    $region25: #{_lambda_.1} parent=1 // pred_fallthru
      _
    // Predicated region
    $region26: #{_lambda_.1} parent=1 // pred_check
      _
    $region27: #{_lambda_.1} parent=1 // pred_check_branch
      %63 = sbr.rel (0) target = $region29
    $region28: #{_lambda_.1} parent=1 // pred_region
      _
    $region29: #{_lambda_.1} parent=1 // pred_fallthru
      _
    // Predicated region
    $region30: #{_lambda_.1} parent=1 // pred_check
      _
    $region31: #{_lambda_.1} parent=1 // pred_check_branch
      %65 = sbr.rel (0) target = $region33
    $region32: #{_lambda_.1} parent=1 // pred_region
      %s67 = ssub.s32 2048, 2048
      %68 = vsyncadd [#allocation9], %s67
      %s69 = sshll.u32 [#allocation8], 4
      %s70 = int_to_ptr.vmem [resolvable:$true] %s69
      %75 = dma.hbm_to_vmem [thread:$0]  %s7, 2048, %s70, [#allocation9], 128, 128, 8
    $region33: #{_lambda_.1} parent=1 // pred_fallthru
      _
    // Predicated region
    $region34: #{_lambda_.1} parent=1 // pred_check
      _
    $region35: #{_lambda_.1} parent=1 // pred_check_branch
      %77 = sbr.rel (0) target = $region37
    $region36: #{_lambda_.1} parent=1 // pred_region
      _
    $region37: #{_lambda_.1} parent=1 // pred_fallthru
      _
    // Predicated region
    $region38: #{_lambda_.1} parent=1 // pred_check
      _
    $region39: #{_lambda_.1} parent=1 // pred_check_branch
      %79 = sbr.rel (0) target = $region41
    $region40: #{_lambda_.1} parent=1 // pred_region
      %s81 = ssub.s32 2048, 2048
      %82 = vsyncadd [#allocation9], %s81
      %s83 = sshll.u32 [#allocation10], 4
      %s84 = int_to_ptr.vmem [resolvable:$true] %s83
      %89 = dma.hbm_to_vmem [thread:$0]  %s9, 2048, %s84, [#allocation9], 128, 128, 8
    $region41: #{_lambda_.1} parent=1 // pred_fallthru
      _
    // Predicated region
    $region42: #{_lambda_.1} parent=1 // pred_check
      _
    $region43: #{_lambda_.1} parent=1 // pred_check_branch
      %91 = sbr.rel (0) target = $region45
    $region44: #{_lambda_.1} parent=1 // pred_region
      _
    $region45: #{_lambda_.1} parent=1 // pred_fallthru
      _
    // Predicated region
    $region46: #{_lambda_.1} parent=1 // pred_check
      _
    $region47: #{_lambda_.1} parent=1 // pred_check_branch
      %93 = sbr.rel (0) target = $region49
    $region48: #{_lambda_.1} parent=1 // pred_region
      %94 = dma.done [#allocation3], 4096
    $region49: #{_lambda_.1} parent=1 // pred_fallthru
      _
    // Predicated region
    $region50: #{_lambda_.1} parent=1 // pred_check
      _
    $region51: #{_lambda_.1} parent=1 // pred_check_branch
      %96 = sbr.rel (0) target = $region53
    $region52: #{_lambda_.1} parent=1 // pred_region
      %97 = dma.done [#allocation6], 12288
    $region53: #{_lambda_.1} parent=1 // pred_fallthru
      _
    // Predicated region
    $region54: #{_lambda_.1} parent=1 // pred_check
      _
    $region55: #{_lambda_.1} parent=1 // pred_check_branch
      %99 = sbr.rel (0) target = $region57
    $region56: #{_lambda_.1} parent=1 // pred_region
      %100 = dma.done [#allocation6], 6144
    $region57: #{_lambda_.1} parent=1 // pred_fallthru
      _
    // Predicated region
    $region58: #{_lambda_.1} parent=1 // pred_check
      _
    $region59: #{_lambda_.1} parent=1 // pred_check_branch
      %102 = sbr.rel (0) target = $region61
    $region60: #{_lambda_.1} parent=1 // pred_region
      %103 = dma.done [#allocation9], 2048
    $region61: #{_lambda_.1} parent=1 // pred_fallthru
      _
    // Predicated region
    $region62: #{_lambda_.1} parent=1 // pred_check
      _
    $region63: #{_lambda_.1} parent=1 // pred_check_branch
      %105 = sbr.rel (0) target = $region65
    $region64: #{_lambda_.1} parent=1 // pred_region
      %106 = dma.done [#allocation9], 2048
    $region65: #{_lambda_.1} parent=1 // pred_fallthru
      _
    %v107 = vld [vmem:[%s0] sm:$0x1]
    %v108 = vld [vmem:[#allocation2] sm:$0xff]
    %v109 = vld [vmem:[#allocation2 + $0x8] sm:$0xff]
    %v110 = vld [vmem:[#allocation2 + $0x10] sm:$0xff]
    %v111 = vld [vmem:[#allocation2 + $0x18] sm:$0xff]
    %v112 = vld [vmem:[#allocation2 + $0x20] sm:$0xff]
    %v113 = vld [vmem:[#allocation2 + $0x28] sm:$0xff]
    %v114 = vld [vmem:[#allocation2 + $0x30] sm:$0xff]
    %v115 = vld [vmem:[#allocation2 + $0x38] sm:$0xff]
    %v116 = vld [vmem:[#allocation2 + $0x40] sm:$0xff]
    %v117 = vld [vmem:[#allocation2 + $0x48] sm:$0xff]
    %v118 = vld [vmem:[#allocation2 + $0x50] sm:$0xff]
    %v119 = vld [vmem:[#allocation2 + $0x58] sm:$0xff]
    %v120 = vld [vmem:[#allocation2 + $0x60] sm:$0xff]
    %v121 = vld [vmem:[#allocation2 + $0x68] sm:$0xff]
    %v122 = vld [vmem:[#allocation2 + $0x70] sm:$0xff]
    %v123 = vld [vmem:[#allocation2 + $0x78] sm:$0xff]
    %v124 = vld [vmem:[#allocation2 + $0x80] sm:$0xff]
    %v125 = vld [vmem:[#allocation2 + $0x88] sm:$0xff]
    %v126 = vld [vmem:[#allocation2 + $0x90] sm:$0xff]
    %v127 = vld [vmem:[#allocation2 + $0x98] sm:$0xff]
    %v128 = vld [vmem:[#allocation2 + $0xa0] sm:$0xff]
    %v129 = vld [vmem:[#allocation2 + $0xa8] sm:$0xff]
    %v130 = vld [vmem:[#allocation2 + $0xb0] sm:$0xff]
    %v131 = vld [vmem:[#allocation2 + $0xb8] sm:$0xff]
    %v132 = vld [vmem:[#allocation2 + $0xc0] sm:$0xff]
    %v133 = vld [vmem:[#allocation2 + $0xc8] sm:$0xff]
    %v134 = vld [vmem:[#allocation2 + $0xd0] sm:$0xff]
    %v135 = vld [vmem:[#allocation2 + $0xd8] sm:$0xff]
    %v136 = vld [vmem:[#allocation2 + $0xe0] sm:$0xff]
    %v137 = vld [vmem:[#allocation2 + $0xe8] sm:$0xff]
    %v138 = vld [vmem:[#allocation2 + $0xf0] sm:$0xff]
    %v139 = vld [vmem:[#allocation2 + $0xf8] sm:$0xff]
    %v140 = vld [vmem:[%s2] sm:$0x3]
    %v142 = vlaneseq
    %v143 = vshrl.u32 %v142, 7
    %v144 = vsub.s32 0, %v143
    %v145 = vrot.slane %v140, %v144
    %v146 = vlaneseq
    %v147 = vshrl.u32 %v146, 7
    %v148 = vsub.s32 1, %v147
    %v149 = vrot.slane %v140, %v148
    %152 = vmatprep.subr.mxu0 %v109
    %153 = vmatpush1.msra.mxu0 %v108
    %154 = vmatprep.subr.mxu0 %v111
    %155 = vmatpush1.msra.mxu0 %v110
    %156 = vmatprep.subr.mxu0 %v113
    %157 = vmatpush1.msra.mxu0 %v112
    %158 = vmatprep.subr.mxu0 %v115
    %159 = vmatpush1.msra.mxu0 %v114
    %160 = vmatprep.subr.mxu0 %v117
    %161 = vmatpush1.msra.mxu0 %v116
    %162 = vmatprep.subr.mxu0 %v119
    %163 = vmatpush1.msra.mxu0 %v118
    %164 = vmatprep.subr.mxu0 %v121
    %165 = vmatpush1.msra.mxu0 %v120
    %166 = vmatprep.subr.mxu0 %v123
    %167 = vmatpush1.msra.mxu0 %v122
    %168 = vmatprep.subr.mxu0 %v125
    %169 = vmatpush1.msra.mxu0 %v124
    %170 = vmatprep.subr.mxu0 %v127
    %171 = vmatpush1.msra.mxu0 %v126
    %172 = vmatprep.subr.mxu0 %v129
    %173 = vmatpush1.msra.mxu0 %v128
    %174 = vmatprep.subr.mxu0 %v131
    %175 = vmatpush1.msra.mxu0 %v130
    %176 = vmatprep.subr.mxu0 %v133
    %177 = vmatpush1.msra.mxu0 %v132
    %178 = vmatprep.subr.mxu0 %v135
    %179 = vmatpush1.msra.mxu0 %v134
    %180 = vmatprep.subr.mxu0 %v137
    %181 = vmatpush1.msra.mxu0 %v136
    %182 = vmatprep.subr.mxu0 %v139
    %183 = vmatpush1.msra.mxu0 %v138
    %184 = vmatprep.subr.mxu0 0.0
    %185 = vmatpush1.msra.mxu0 0.0
    %186 = vmatprep.subr.mxu0 0.0
    %187 = vmatpush1.msra.mxu0 0.0
    %188 = vmatprep.subr.mxu0 0.0
    %189 = vmatpush1.msra.mxu0 0.0
    %190 = vmatprep.subr.mxu0 0.0
    %191 = vmatpush1.msra.mxu0 0.0
    %192 = vmatprep.subr.mxu0 0.0
    %193 = vmatpush1.msra.mxu0 0.0
    %194 = vmatprep.subr.mxu0 0.0
    %195 = vmatpush1.msra.mxu0 0.0
    %196 = vmatprep.subr.mxu0 0.0
    %197 = vmatpush1.msra.mxu0 0.0
    %198 = vmatprep.subr.mxu0 0.0
    %199 = vmatpush1.msra.mxu0 0.0
    %200 = vmatprep.subr.mxu0 0.0
    %201 = vmatpush1.msra.mxu0 0.0
    %202 = vmatprep.subr.mxu0 0.0
    %203 = vmatpush1.msra.mxu0 0.0
    %204 = vmatprep.subr.mxu0 0.0
    %205 = vmatpush1.msra.mxu0 0.0
    %206 = vmatprep.subr.mxu0 0.0
    %207 = vmatpush1.msra.mxu0 0.0
    %208 = vmatprep.subr.mxu0 0.0
    %209 = vmatpush1.msra.mxu0 0.0
    %210 = vmatprep.subr.mxu0 0.0
    %211 = vmatpush1.msra.mxu0 0.0
    %212 = vmatprep.subr.mxu0 0.0
    %213 = vmatpush1.msra.mxu0 0.0
    %214 = vmatprep.subr.mxu0 0.0
    %215 = vmatpush1.msra.mxu0 0.0
    %216 = vmatprep.mubr.f32.mxu0 0.0
    %217 = vmatmul.mubr.f32.gmra.mrb[0].mxu0 %v107
    %v218 = vpop.f32.mrb[0].mxu0
    %v219 = vadd.f32 %v145, %v218
    %v220 = vpop.f32.mrb[0].mxu0
    %v221 = vadd.f32 %v149, %v220
    %222 = vdwg.mxu0
    %v223 = vmax.f32 %v219, 0.0
    %v224 = vmax.f32 %v221, 0.0
    %v225 = vld [vmem:[#allocation5] sm:$0xff]
    %v226 = vld [vmem:[#allocation5 + $0x8] sm:$0xff]
    %v227 = vld [vmem:[#allocation5 + $0x10] sm:$0xff]
    %v228 = vld [vmem:[#allocation5 + $0x18] sm:$0xff]
    %v229 = vld [vmem:[#allocation5 + $0x20] sm:$0xff]
    %v230 = vld [vmem:[#allocation5 + $0x28] sm:$0xff]
    %v231 = vld [vmem:[#allocation5 + $0x30] sm:$0xff]
    %v232 = vld [vmem:[#allocation5 + $0x38] sm:$0xff]
    %v233 = vld [vmem:[#allocation5 + $0x40] sm:$0xff]
    %v234 = vld [vmem:[#allocation5 + $0x48] sm:$0xff]
    %v235 = vld [vmem:[#allocation5 + $0x50] sm:$0xff]
    %v236 = vld [vmem:[#allocation5 + $0x58] sm:$0xff]
    %v237 = vld [vmem:[#allocation5 + $0x60] sm:$0xff]
    %v238 = vld [vmem:[#allocation5 + $0x68] sm:$0xff]
    %v239 = vld [vmem:[#allocation5 + $0x70] sm:$0xff]
    %v240 = vld [vmem:[#allocation5 + $0x78] sm:$0xff]
    %v241 = vld [vmem:[#allocation5 + $0x80] sm:$0xff]
    %v242 = vld [vmem:[#allocation5 + $0x88] sm:$0xff]
    %v243 = vld [vmem:[#allocation5 + $0x90] sm:$0xff]
    %v244 = vld [vmem:[#allocation5 + $0x98] sm:$0xff]
    %v245 = vld [vmem:[#allocation5 + $0xa0] sm:$0xff]
    %v246 = vld [vmem:[#allocation5 + $0xa8] sm:$0xff]
    %v247 = vld [vmem:[#allocation5 + $0xb0] sm:$0xff]
    %v248 = vld [vmem:[#allocation5 + $0xb8] sm:$0xff]
    %v249 = vld [vmem:[#allocation5 + $0xc0] sm:$0xff]
    %v250 = vld [vmem:[#allocation5 + $0xc8] sm:$0xff]
    %v251 = vld [vmem:[#allocation5 + $0xd0] sm:$0xff]
    %v252 = vld [vmem:[#allocation5 + $0xd8] sm:$0xff]
    %v253 = vld [vmem:[#allocation5 + $0xe0] sm:$0xff]
    %v254 = vld [vmem:[#allocation5 + $0xe8] sm:$0xff]
    %v255 = vld [vmem:[#allocation5 + $0xf0] sm:$0xff]
    %v256 = vld [vmem:[#allocation5 + $0xf8] sm:$0xff]
    %v257 = vld [vmem:[#allocation5 + $0x100] sm:$0xff]
    %v258 = vld [vmem:[#allocation5 + $0x108] sm:$0xff]
    %v259 = vld [vmem:[#allocation5 + $0x110] sm:$0xff]
    %v260 = vld [vmem:[#allocation5 + $0x118] sm:$0xff]
    %v261 = vld [vmem:[#allocation5 + $0x120] sm:$0xff]
    %v262 = vld [vmem:[#allocation5 + $0x128] sm:$0xff]
    %v263 = vld [vmem:[#allocation5 + $0x130] sm:$0xff]
    %v264 = vld [vmem:[#allocation5 + $0x138] sm:$0xff]
    %v265 = vld [vmem:[#allocation5 + $0x140] sm:$0xff]
    %v266 = vld [vmem:[#allocation5 + $0x148] sm:$0xff]
    %v267 = vld [vmem:[#allocation5 + $0x150] sm:$0xff]
    %v268 = vld [vmem:[#allocation5 + $0x158] sm:$0xff]
    %v269 = vld [vmem:[#allocation5 + $0x160] sm:$0xff]
    %v270 = vld [vmem:[#allocation5 + $0x168] sm:$0xff]
    %v271 = vld [vmem:[#allocation5 + $0x170] sm:$0xff]
    %v272 = vld [vmem:[#allocation5 + $0x178] sm:$0xff]
    %v273 = vld [vmem:[#allocation5 + $0x180] sm:$0xff]
    %v274 = vld [vmem:[#allocation5 + $0x188] sm:$0xff]
    %v275 = vld [vmem:[#allocation5 + $0x190] sm:$0xff]
    %v276 = vld [vmem:[#allocation5 + $0x198] sm:$0xff]
    %v277 = vld [vmem:[#allocation5 + $0x1a0] sm:$0xff]
    %v278 = vld [vmem:[#allocation5 + $0x1a8] sm:$0xff]
    %v279 = vld [vmem:[#allocation5 + $0x1b0] sm:$0xff]
    %v280 = vld [vmem:[#allocation5 + $0x1b8] sm:$0xff]
    %v281 = vld [vmem:[#allocation5 + $0x1c0] sm:$0xff]
    %v282 = vld [vmem:[#allocation5 + $0x1c8] sm:$0xff]
    %v283 = vld [vmem:[#allocation5 + $0x1d0] sm:$0xff]
    %v284 = vld [vmem:[#allocation5 + $0x1d8] sm:$0xff]
    %v285 = vld [vmem:[#allocation5 + $0x1e0] sm:$0xff]
    %v286 = vld [vmem:[#allocation5 + $0x1e8] sm:$0xff]
    %v287 = vld [vmem:[#allocation5 + $0x1f0] sm:$0xff]
    %v288 = vld [vmem:[#allocation5 + $0x1f8] sm:$0xff]
    %v289 = vld [vmem:[#allocation5 + $0x200] sm:$0xff]
    %v290 = vld [vmem:[#allocation5 + $0x208] sm:$0xff]
    %v291 = vld [vmem:[#allocation5 + $0x210] sm:$0xff]
    %v292 = vld [vmem:[#allocation5 + $0x218] sm:$0xff]
    %v293 = vld [vmem:[#allocation5 + $0x220] sm:$0xff]
    %v294 = vld [vmem:[#allocation5 + $0x228] sm:$0xff]
    %v295 = vld [vmem:[#allocation5 + $0x230] sm:$0xff]
    %v296 = vld [vmem:[#allocation5 + $0x238] sm:$0xff]
    %v297 = vld [vmem:[#allocation5 + $0x240] sm:$0xff]
    %v298 = vld [vmem:[#allocation5 + $0x248] sm:$0xff]
    %v299 = vld [vmem:[#allocation5 + $0x250] sm:$0xff]
    %v300 = vld [vmem:[#allocation5 + $0x258] sm:$0xff]
    %v301 = vld [vmem:[#allocation5 + $0x260] sm:$0xff]
    %v302 = vld [vmem:[#allocation5 + $0x268] sm:$0xff]
    %v303 = vld [vmem:[#allocation5 + $0x270] sm:$0xff]
    %v304 = vld [vmem:[#allocation5 + $0x278] sm:$0xff]
    %v305 = vld [vmem:[#allocation5 + $0x280] sm:$0xff]
    %v306 = vld [vmem:[#allocation5 + $0x288] sm:$0xff]
    %v307 = vld [vmem:[#allocation5 + $0x290] sm:$0xff]
    %v308 = vld [vmem:[#allocation5 + $0x298] sm:$0xff]
    %v309 = vld [vmem:[#allocation5 + $0x2a0] sm:$0xff]
    %v310 = vld [vmem:[#allocation5 + $0x2a8] sm:$0xff]
    %v311 = vld [vmem:[#allocation5 + $0x2b0] sm:$0xff]
    %v312 = vld [vmem:[#allocation5 + $0x2b8] sm:$0xff]
    %v313 = vld [vmem:[#allocation5 + $0x2c0] sm:$0xff]
    %v314 = vld [vmem:[#allocation5 + $0x2c8] sm:$0xff]
    %v315 = vld [vmem:[#allocation5 + $0x2d0] sm:$0xff]
    %v316 = vld [vmem:[#allocation5 + $0x2d8] sm:$0xff]
    %v317 = vld [vmem:[#allocation5 + $0x2e0] sm:$0xff]
    %v318 = vld [vmem:[#allocation5 + $0x2e8] sm:$0xff]
    %v319 = vld [vmem:[#allocation5 + $0x2f0] sm:$0xff]
    %v320 = vld [vmem:[#allocation5 + $0x2f8] sm:$0xff]
    %v321 = vld [vmem:[%s4] sm:$0x7]
    %v323 = vlaneseq
    %v324 = vshrl.u32 %v323, 7
    %v325 = vsub.s32 0, %v324
    %v326 = vrot.slane %v321, %v325
    %v327 = vlaneseq
    %v328 = vshrl.u32 %v327, 7
    %v329 = vsub.s32 1, %v328
    %v330 = vrot.slane %v321, %v329
    %v331 = vlaneseq
    %v332 = vshrl.u32 %v331, 7
    %v333 = vsub.s32 2, %v332
    %v334 = vrot.slane %v321, %v333
    %338 = vmatprep.subr.mxu0 %v226
    %339 = vmatpush1.msra.mxu0 %v225
    %340 = vmatprep.subr.mxu0 %v229
    %341 = vmatpush1.msra.mxu0 %v228
    %342 = vmatprep.subr.mxu0 %v232
    %343 = vmatpush1.msra.mxu0 %v231
    %344 = vmatprep.subr.mxu0 %v235
    %345 = vmatpush1.msra.mxu0 %v234
    %346 = vmatprep.subr.mxu0 %v238
    %347 = vmatpush1.msra.mxu0 %v237
    %348 = vmatprep.subr.mxu0 %v241
    %349 = vmatpush1.msra.mxu0 %v240
    %350 = vmatprep.subr.mxu0 %v244
    %351 = vmatpush1.msra.mxu0 %v243
    %352 = vmatprep.subr.mxu0 %v247
    %353 = vmatpush1.msra.mxu0 %v246
    %354 = vmatprep.subr.mxu0 %v250
    %355 = vmatpush1.msra.mxu0 %v249
    %356 = vmatprep.subr.mxu0 %v253
    %357 = vmatpush1.msra.mxu0 %v252
    %358 = vmatprep.subr.mxu0 %v256
    %359 = vmatpush1.msra.mxu0 %v255
    %360 = vmatprep.subr.mxu0 %v259
    %361 = vmatpush1.msra.mxu0 %v258
    %362 = vmatprep.subr.mxu0 %v262
    %363 = vmatpush1.msra.mxu0 %v261
    %364 = vmatprep.subr.mxu0 %v265
    %365 = vmatpush1.msra.mxu0 %v264
    %366 = vmatprep.subr.mxu0 %v268
    %367 = vmatpush1.msra.mxu0 %v267
    %368 = vmatprep.subr.mxu0 %v271
    %369 = vmatpush1.msra.mxu0 %v270
    %370 = vmatprep.subr.mxu0 %v274
    %371 = vmatpush1.msra.mxu0 %v273
    %372 = vmatprep.subr.mxu0 %v277
    %373 = vmatpush1.msra.mxu0 %v276
    %374 = vmatprep.subr.mxu0 %v280
    %375 = vmatpush1.msra.mxu0 %v279
    %376 = vmatprep.subr.mxu0 %v283
    %377 = vmatpush1.msra.mxu0 %v282
    %378 = vmatprep.subr.mxu0 %v286
    %379 = vmatpush1.msra.mxu0 %v285
    %380 = vmatprep.subr.mxu0 %v289
    %381 = vmatpush1.msra.mxu0 %v288
    %382 = vmatprep.subr.mxu0 %v292
    %383 = vmatpush1.msra.mxu0 %v291
    %384 = vmatprep.subr.mxu0 %v295
    %385 = vmatpush1.msra.mxu0 %v294
    %386 = vmatprep.subr.mxu0 %v298
    %387 = vmatpush1.msra.mxu0 %v297
    %388 = vmatprep.subr.mxu0 %v301
    %389 = vmatpush1.msra.mxu0 %v300
    %390 = vmatprep.subr.mxu0 %v304
    %391 = vmatpush1.msra.mxu0 %v303
    %392 = vmatprep.subr.mxu0 %v307
    %393 = vmatpush1.msra.mxu0 %v306
    %394 = vmatprep.subr.mxu0 %v310
    %395 = vmatpush1.msra.mxu0 %v309
    %396 = vmatprep.subr.mxu0 %v313
    %397 = vmatpush1.msra.mxu0 %v312
    %398 = vmatprep.subr.mxu0 %v316
    %399 = vmatpush1.msra.mxu0 %v315
    %400 = vmatprep.subr.mxu0 %v319
    %401 = vmatpush1.msra.mxu0 %v318
    %402 = vmatprep.mubr.f32.mxu0 %v224
    %403 = vmatmul.mubr.f32.gmra.mrb[0].mxu0 %v223
    %v404 = vpop.f32.mrb[0].mxu0
    %v405 = vadd.f32 %v326, %v404
    %v406 = vpop.f32.mrb[0].mxu0
    %v407 = vadd.f32 %v330, %v406
    %408 = vdwg.mxu0
    %409 = vmatprep.subr.mxu0 0.0
    %410 = vmatpush1.msra.mxu0 %v227
    %411 = vmatprep.subr.mxu0 0.0
    %412 = vmatpush1.msra.mxu0 %v230
    %413 = vmatprep.subr.mxu0 0.0
    %414 = vmatpush1.msra.mxu0 %v233
    %415 = vmatprep.subr.mxu0 0.0
    %416 = vmatpush1.msra.mxu0 %v236
    %417 = vmatprep.subr.mxu0 0.0
    %418 = vmatpush1.msra.mxu0 %v239
    %419 = vmatprep.subr.mxu0 0.0
    %420 = vmatpush1.msra.mxu0 %v242
    %421 = vmatprep.subr.mxu0 0.0
    %422 = vmatpush1.msra.mxu0 %v245
    %423 = vmatprep.subr.mxu0 0.0
    %424 = vmatpush1.msra.mxu0 %v248
    %425 = vmatprep.subr.mxu0 0.0
    %426 = vmatpush1.msra.mxu0 %v251
    %427 = vmatprep.subr.mxu0 0.0
    %428 = vmatpush1.msra.mxu0 %v254
    %429 = vmatprep.subr.mxu0 0.0
    %430 = vmatpush1.msra.mxu0 %v257
    %431 = vmatprep.subr.mxu0 0.0
    %432 = vmatpush1.msra.mxu0 %v260
    %433 = vmatprep.subr.mxu0 0.0
    %434 = vmatpush1.msra.mxu0 %v263
    %435 = vmatprep.subr.mxu0 0.0
    %436 = vmatpush1.msra.mxu0 %v266
    %437 = vmatprep.subr.mxu0 0.0
    %438 = vmatpush1.msra.mxu0 %v269
    %439 = vmatprep.subr.mxu0 0.0
    %440 = vmatpush1.msra.mxu0 %v272
    %441 = vmatprep.subr.mxu0 0.0
    %442 = vmatpush1.msra.mxu0 %v275
    %443 = vmatprep.subr.mxu0 0.0
    %444 = vmatpush1.msra.mxu0 %v278
    %445 = vmatprep.subr.mxu0 0.0
    %446 = vmatpush1.msra.mxu0 %v281
    %447 = vmatprep.subr.mxu0 0.0
    %448 = vmatpush1.msra.mxu0 %v284
    %449 = vmatprep.subr.mxu0 0.0
    %450 = vmatpush1.msra.mxu0 %v287
    %451 = vmatprep.subr.mxu0 0.0
    %452 = vmatpush1.msra.mxu0 %v290
    %453 = vmatprep.subr.mxu0 0.0
    %454 = vmatpush1.msra.mxu0 %v293
    %455 = vmatprep.subr.mxu0 0.0
    %456 = vmatpush1.msra.mxu0 %v296
    %457 = vmatprep.subr.mxu0 0.0
    %458 = vmatpush1.msra.mxu0 %v299
    %459 = vmatprep.subr.mxu0 0.0
    %460 = vmatpush1.msra.mxu0 %v302
    %461 = vmatprep.subr.mxu0 0.0
    %462 = vmatpush1.msra.mxu0 %v305
    %463 = vmatprep.subr.mxu0 0.0
    %464 = vmatpush1.msra.mxu0 %v308
    %465 = vmatprep.subr.mxu0 0.0
    %466 = vmatpush1.msra.mxu0 %v311
    %467 = vmatprep.subr.mxu0 0.0
    %468 = vmatpush1.msra.mxu0 %v314
    %469 = vmatprep.subr.mxu0 0.0
    %470 = vmatpush1.msra.mxu0 %v317
    %471 = vmatprep.subr.mxu0 0.0
    %472 = vmatpush1.msra.mxu0 %v320
    %473 = vmatprep.mubr.f32.mxu0 %v224
    %474 = vmatmul.mubr.f32.gmra.mrb[0].mxu0 %v223
    %v475 = vpop.f32.mrb[0].mxu0
    %v476 = vadd.f32 %v334, %v475
    %v477 = vpop.f32.mrb[0].mxu0
    %478 = vdwg.mxu0
    %v479 = vmax.f32 %v405, 0.0
    %v480 = vmax.f32 %v407, 0.0
    %v481 = vmax.f32 %v476, 0.0
    %v482 = vld [vmem:[#allocation7] sm:$0xff]
    %v483 = vld [vmem:[#allocation7 + $0x8] sm:$0xff]
    %v484 = vld [vmem:[#allocation7 + $0x10] sm:$0xff]
    %v485 = vld [vmem:[#allocation7 + $0x18] sm:$0xff]
    %v486 = vld [vmem:[#allocation7 + $0x20] sm:$0xff]
    %v487 = vld [vmem:[#allocation7 + $0x28] sm:$0xff]
    %v488 = vld [vmem:[#allocation7 + $0x30] sm:$0xff]
    %v489 = vld [vmem:[#allocation7 + $0x38] sm:$0xff]
    %v490 = vld [vmem:[#allocation7 + $0x40] sm:$0xff]
    %v491 = vld [vmem:[#allocation7 + $0x48] sm:$0xff]
    %v492 = vld [vmem:[#allocation7 + $0x50] sm:$0xff]
    %v493 = vld [vmem:[#allocation7 + $0x58] sm:$0xff]
    %v494 = vld [vmem:[#allocation7 + $0x60] sm:$0xff]
    %v495 = vld [vmem:[#allocation7 + $0x68] sm:$0xff]
    %v496 = vld [vmem:[#allocation7 + $0x70] sm:$0xff]
    %v497 = vld [vmem:[#allocation7 + $0x78] sm:$0xff]
    %v498 = vld [vmem:[#allocation7 + $0x80] sm:$0xff]
    %v499 = vld [vmem:[#allocation7 + $0x88] sm:$0xff]
    %v500 = vld [vmem:[#allocation7 + $0x90] sm:$0xff]
    %v501 = vld [vmem:[#allocation7 + $0x98] sm:$0xff]
    %v502 = vld [vmem:[#allocation7 + $0xa0] sm:$0xff]
    %v503 = vld [vmem:[#allocation7 + $0xa8] sm:$0xff]
    %v504 = vld [vmem:[#allocation7 + $0xb0] sm:$0xff]
    %v505 = vld [vmem:[#allocation7 + $0xb8] sm:$0xff]
    %v506 = vld [vmem:[#allocation7 + $0xc0] sm:$0xff]
    %v507 = vld [vmem:[#allocation7 + $0xc8] sm:$0xff]
    %v508 = vld [vmem:[#allocation7 + $0xd0] sm:$0xff]
    %v509 = vld [vmem:[#allocation7 + $0xd8] sm:$0xff]
    %v510 = vld [vmem:[#allocation7 + $0xe0] sm:$0xff]
    %v511 = vld [vmem:[#allocation7 + $0xe8] sm:$0xff]
    %v512 = vld [vmem:[#allocation7 + $0xf0] sm:$0xff]
    %v513 = vld [vmem:[#allocation7 + $0xf8] sm:$0xff]
    %v514 = vld [vmem:[#allocation7 + $0x100] sm:$0xff]
    %v515 = vld [vmem:[#allocation7 + $0x108] sm:$0xff]
    %v516 = vld [vmem:[#allocation7 + $0x110] sm:$0xff]
    %v517 = vld [vmem:[#allocation7 + $0x118] sm:$0xff]
    %v518 = vld [vmem:[#allocation7 + $0x120] sm:$0xff]
    %v519 = vld [vmem:[#allocation7 + $0x128] sm:$0xff]
    %v520 = vld [vmem:[#allocation7 + $0x130] sm:$0xff]
    %v521 = vld [vmem:[#allocation7 + $0x138] sm:$0xff]
    %v522 = vld [vmem:[#allocation7 + $0x140] sm:$0xff]
    %v523 = vld [vmem:[#allocation7 + $0x148] sm:$0xff]
    %v524 = vld [vmem:[#allocation7 + $0x150] sm:$0xff]
    %v525 = vld [vmem:[#allocation7 + $0x158] sm:$0xff]
    %v526 = vld [vmem:[#allocation7 + $0x160] sm:$0xff]
    %v527 = vld [vmem:[#allocation7 + $0x168] sm:$0xff]
    %v528 = vld [vmem:[#allocation7 + $0x170] sm:$0xff]
    %v529 = vld [vmem:[#allocation7 + $0x178] sm:$0xff]
    %v530 = vld [vmem:[%s6] sm:$0x1]
    %531 = vmatprep.subr.mxu0 0.0
    %532 = vmatpush1.msra.mxu0 %v482
    %533 = vmatprep.subr.mxu0 0.0
    %534 = vmatpush1.msra.mxu0 %v483
    %535 = vmatprep.subr.mxu0 0.0
    %536 = vmatpush1.msra.mxu0 %v484
    %537 = vmatprep.subr.mxu0 0.0
    %538 = vmatpush1.msra.mxu0 %v485
    %539 = vmatprep.subr.mxu0 0.0
    %540 = vmatpush1.msra.mxu0 %v486
    %541 = vmatprep.subr.mxu0 0.0
    %542 = vmatpush1.msra.mxu0 %v487
    %543 = vmatprep.subr.mxu0 0.0
    %544 = vmatpush1.msra.mxu0 %v488
    %545 = vmatprep.subr.mxu0 0.0
    %546 = vmatpush1.msra.mxu0 %v489
    %547 = vmatprep.subr.mxu0 0.0
    %548 = vmatpush1.msra.mxu0 %v490
    %549 = vmatprep.subr.mxu0 0.0
    %550 = vmatpush1.msra.mxu0 %v491
    %551 = vmatprep.subr.mxu0 0.0
    %552 = vmatpush1.msra.mxu0 %v492
    %553 = vmatprep.subr.mxu0 0.0
    %554 = vmatpush1.msra.mxu0 %v493
    %555 = vmatprep.subr.mxu0 0.0
    %556 = vmatpush1.msra.mxu0 %v494
    %557 = vmatprep.subr.mxu0 0.0
    %558 = vmatpush1.msra.mxu0 %v495
    %559 = vmatprep.subr.mxu0 0.0
    %560 = vmatpush1.msra.mxu0 %v496
    %561 = vmatprep.subr.mxu0 0.0
    %562 = vmatpush1.msra.mxu0 %v497
    %563 = vmatprep.subr.mxu0 0.0
    %564 = vmatpush1.msra.mxu0 %v498
    %565 = vmatprep.subr.mxu0 0.0
    %566 = vmatpush1.msra.mxu0 %v499
    %567 = vmatprep.subr.mxu0 0.0
    %568 = vmatpush1.msra.mxu0 %v500
    %569 = vmatprep.subr.mxu0 0.0
    %570 = vmatpush1.msra.mxu0 %v501
    %571 = vmatprep.subr.mxu0 0.0
    %572 = vmatpush1.msra.mxu0 %v502
    %573 = vmatprep.subr.mxu0 0.0
    %574 = vmatpush1.msra.mxu0 %v503
    %575 = vmatprep.subr.mxu0 0.0
    %576 = vmatpush1.msra.mxu0 %v504
    %577 = vmatprep.subr.mxu0 0.0
    %578 = vmatpush1.msra.mxu0 %v505
    %579 = vmatprep.subr.mxu0 0.0
    %580 = vmatpush1.msra.mxu0 %v506
    %581 = vmatprep.subr.mxu0 0.0
    %582 = vmatpush1.msra.mxu0 %v507
    %583 = vmatprep.subr.mxu0 0.0
    %584 = vmatpush1.msra.mxu0 %v508
    %585 = vmatprep.subr.mxu0 0.0
    %586 = vmatpush1.msra.mxu0 %v509
    %587 = vmatprep.subr.mxu0 0.0
    %588 = vmatpush1.msra.mxu0 %v510
    %589 = vmatprep.subr.mxu0 0.0
    %590 = vmatpush1.msra.mxu0 %v511
    %591 = vmatprep.subr.mxu0 0.0
    %592 = vmatpush1.msra.mxu0 %v512
    %593 = vmatprep.subr.mxu0 0.0
    %594 = vmatpush1.msra.mxu0 %v513
    %595 = vmatprep.mubr.f32.mxu0 %v480
    %596 = vmatmul.mubr.f32.gmra.mrb[0].mxu0 %v479
    %v597 = vpop.f32.mrb[0].mxu0
    %v598 = vadd.f32 %v530, %v597
    %v599 = vpop.f32.mrb[0].mxu0
    %600 = vdwg.mxu0
    %601 = vmatprep.subr.mxu0 0.0
    %602 = vmatpush1.msra.mxu0 %v514
    %603 = vmatprep.subr.mxu0 0.0
    %604 = vmatpush1.msra.mxu0 %v515
    %605 = vmatprep.subr.mxu0 0.0
    %606 = vmatpush1.msra.mxu0 %v516
    %607 = vmatprep.subr.mxu0 0.0
    %608 = vmatpush1.msra.mxu0 %v517
    %609 = vmatprep.subr.mxu0 0.0
    %610 = vmatpush1.msra.mxu0 %v518
    %611 = vmatprep.subr.mxu0 0.0
    %612 = vmatpush1.msra.mxu0 %v519
    %613 = vmatprep.subr.mxu0 0.0
    %614 = vmatpush1.msra.mxu0 %v520
    %615 = vmatprep.subr.mxu0 0.0
    %616 = vmatpush1.msra.mxu0 %v521
    %617 = vmatprep.subr.mxu0 0.0
    %618 = vmatpush1.msra.mxu0 %v522
    %619 = vmatprep.subr.mxu0 0.0
    %620 = vmatpush1.msra.mxu0 %v523
    %621 = vmatprep.subr.mxu0 0.0
    %622 = vmatpush1.msra.mxu0 %v524
    %623 = vmatprep.subr.mxu0 0.0
    %624 = vmatpush1.msra.mxu0 %v525
    %625 = vmatprep.subr.mxu0 0.0
    %626 = vmatpush1.msra.mxu0 %v526
    %627 = vmatprep.subr.mxu0 0.0
    %628 = vmatpush1.msra.mxu0 %v527
    %629 = vmatprep.subr.mxu0 0.0
    %630 = vmatpush1.msra.mxu0 %v528
    %631 = vmatprep.subr.mxu0 0.0
    %632 = vmatpush1.msra.mxu0 %v529
    %633 = vmatprep.subr.mxu0 0.0
    %634 = vmatpush1.msra.mxu0 0.0
    %635 = vmatprep.subr.mxu0 0.0
    %636 = vmatpush1.msra.mxu0 0.0
    %637 = vmatprep.subr.mxu0 0.0
    %638 = vmatpush1.msra.mxu0 0.0
    %639 = vmatprep.subr.mxu0 0.0
    %640 = vmatpush1.msra.mxu0 0.0
    %641 = vmatprep.subr.mxu0 0.0
    %642 = vmatpush1.msra.mxu0 0.0
    %643 = vmatprep.subr.mxu0 0.0
    %644 = vmatpush1.msra.mxu0 0.0
    %645 = vmatprep.subr.mxu0 0.0
    %646 = vmatpush1.msra.mxu0 0.0
    %647 = vmatprep.subr.mxu0 0.0
    %648 = vmatpush1.msra.mxu0 0.0
    %649 = vmatprep.subr.mxu0 0.0
    %650 = vmatpush1.msra.mxu0 0.0
    %651 = vmatprep.subr.mxu0 0.0
    %652 = vmatpush1.msra.mxu0 0.0
    %653 = vmatprep.subr.mxu0 0.0
    %654 = vmatpush1.msra.mxu0 0.0
    %655 = vmatprep.subr.mxu0 0.0
    %656 = vmatpush1.msra.mxu0 0.0
    %657 = vmatprep.subr.mxu0 0.0
    %658 = vmatpush1.msra.mxu0 0.0
    %659 = vmatprep.subr.mxu0 0.0
    %660 = vmatpush1.msra.mxu0 0.0
    %661 = vmatprep.subr.mxu0 0.0
    %662 = vmatpush1.msra.mxu0 0.0
    %663 = vmatprep.subr.mxu0 0.0
    %664 = vmatpush1.msra.mxu0 0.0
    %665 = vmatprep.mubr.f32.mxu0 0.0
    %666 = vmatmul.mubr.f32.gmra.mrb[0].mxu0 %v481
    %v667 = vpop.f32.mrb[0].mxu0
    %v668 = vadd.f32 %v598, %v667
    %v669 = vpop.f32.mrb[0].mxu0
    %670 = vdwg.mxu0
    %v671 = vmax.f32 %v668, 0.0
    %v672 = vld [vmem:[#allocation8] sm:$0xff]
    %v673 = vld [vmem:[#allocation8 + $0x8] sm:$0xff]
    %v674 = vld [vmem:[#allocation8 + $0x10] sm:$0xff]
    %v675 = vld [vmem:[#allocation8 + $0x18] sm:$0xff]
    %v676 = vld [vmem:[#allocation8 + $0x20] sm:$0xff]
    %v677 = vld [vmem:[#allocation8 + $0x28] sm:$0xff]
    %v678 = vld [vmem:[#allocation8 + $0x30] sm:$0xff]
    %v679 = vld [vmem:[#allocation8 + $0x38] sm:$0xff]
    %v680 = vld [vmem:[#allocation8 + $0x40] sm:$0xff]
    %v681 = vld [vmem:[#allocation8 + $0x48] sm:$0xff]
    %v682 = vld [vmem:[#allocation8 + $0x50] sm:$0xff]
    %v683 = vld [vmem:[#allocation8 + $0x58] sm:$0xff]
    %v684 = vld [vmem:[#allocation8 + $0x60] sm:$0xff]
    %v685 = vld [vmem:[#allocation8 + $0x68] sm:$0xff]
    %v686 = vld [vmem:[#allocation8 + $0x70] sm:$0xff]
    %v687 = vld [vmem:[#allocation8 + $0x78] sm:$0xff]
    %v688 = vld [vmem:[%s8] sm:$0x1]
    %689 = vmatprep.subr.mxu0 0.0
    %690 = vmatpush1.msra.mxu0 %v672
    %691 = vmatprep.subr.mxu0 0.0
    %692 = vmatpush1.msra.mxu0 %v673
    %693 = vmatprep.subr.mxu0 0.0
    %694 = vmatpush1.msra.mxu0 %v674
    %695 = vmatprep.subr.mxu0 0.0
    %696 = vmatpush1.msra.mxu0 %v675
    %697 = vmatprep.subr.mxu0 0.0
    %698 = vmatpush1.msra.mxu0 %v676
    %699 = vmatprep.subr.mxu0 0.0
    %700 = vmatpush1.msra.mxu0 %v677
    %701 = vmatprep.subr.mxu0 0.0
    %702 = vmatpush1.msra.mxu0 %v678
    %703 = vmatprep.subr.mxu0 0.0
    %704 = vmatpush1.msra.mxu0 %v679
    %705 = vmatprep.subr.mxu0 0.0
    %706 = vmatpush1.msra.mxu0 %v680
    %707 = vmatprep.subr.mxu0 0.0
    %708 = vmatpush1.msra.mxu0 %v681
    %709 = vmatprep.subr.mxu0 0.0
    %710 = vmatpush1.msra.mxu0 %v682
    %711 = vmatprep.subr.mxu0 0.0
    %712 = vmatpush1.msra.mxu0 %v683
    %713 = vmatprep.subr.mxu0 0.0
    %714 = vmatpush1.msra.mxu0 %v684
    %715 = vmatprep.subr.mxu0 0.0
    %716 = vmatpush1.msra.mxu0 %v685
    %717 = vmatprep.subr.mxu0 0.0
    %718 = vmatpush1.msra.mxu0 %v686
    %719 = vmatprep.subr.mxu0 0.0
    %720 = vmatpush1.msra.mxu0 %v687
    %721 = vmatprep.subr.mxu0 0.0
    %722 = vmatpush1.msra.mxu0 0.0
    %723 = vmatprep.subr.mxu0 0.0
    %724 = vmatpush1.msra.mxu0 0.0
    %725 = vmatprep.subr.mxu0 0.0
    %726 = vmatpush1.msra.mxu0 0.0
    %727 = vmatprep.subr.mxu0 0.0
    %728 = vmatpush1.msra.mxu0 0.0
    %729 = vmatprep.subr.mxu0 0.0
    %730 = vmatpush1.msra.mxu0 0.0
    %731 = vmatprep.subr.mxu0 0.0
    %732 = vmatpush1.msra.mxu0 0.0
    %733 = vmatprep.subr.mxu0 0.0
    %734 = vmatpush1.msra.mxu0 0.0
    %735 = vmatprep.subr.mxu0 0.0
    %736 = vmatpush1.msra.mxu0 0.0
    %737 = vmatprep.subr.mxu0 0.0
    %738 = vmatpush1.msra.mxu0 0.0
    %739 = vmatprep.subr.mxu0 0.0
    %740 = vmatpush1.msra.mxu0 0.0
    %741 = vmatprep.subr.mxu0 0.0
    %742 = vmatpush1.msra.mxu0 0.0
    %743 = vmatprep.subr.mxu0 0.0
    %744 = vmatpush1.msra.mxu0 0.0
    %745 = vmatprep.subr.mxu0 0.0
    %746 = vmatpush1.msra.mxu0 0.0
    %747 = vmatprep.subr.mxu0 0.0
    %748 = vmatpush1.msra.mxu0 0.0
    %749 = vmatprep.subr.mxu0 0.0
    %750 = vmatpush1.msra.mxu0 0.0
    %751 = vmatprep.subr.mxu0 0.0
    %752 = vmatpush1.msra.mxu0 0.0
    %753 = vmatprep.mubr.f32.mxu0 0.0
    %754 = vmatmul.mubr.f32.gmra.mrb[0].mxu0 %v671
    %v755 = vpop.f32.mrb[0].mxu0
    %v756 = vadd.f32 %v688, %v755
    %v757 = vpop.f32.mrb[0].mxu0
    %758 = vdwg.mxu0
    %v759 = vmax.f32 %v756, 0.0
    %v760 = vld [vmem:[#allocation10] sm:$0xff]
    %v761 = vld [vmem:[#allocation10 + $0x8] sm:$0xff]
    %v762 = vld [vmem:[#allocation10 + $0x10] sm:$0xff]
    %v763 = vld [vmem:[#allocation10 + $0x18] sm:$0xff]
    %v764 = vld [vmem:[#allocation10 + $0x20] sm:$0xff]
    %v765 = vld [vmem:[#allocation10 + $0x28] sm:$0xff]
    %v766 = vld [vmem:[#allocation10 + $0x30] sm:$0xff]
    %v767 = vld [vmem:[#allocation10 + $0x38] sm:$0xff]
    %v768 = vld [vmem:[#allocation10 + $0x40] sm:$0xff]
    %v769 = vld [vmem:[#allocation10 + $0x48] sm:$0xff]
    %v770 = vld [vmem:[#allocation10 + $0x50] sm:$0xff]
    %v771 = vld [vmem:[#allocation10 + $0x58] sm:$0xff]
    %v772 = vld [vmem:[#allocation10 + $0x60] sm:$0xff]
    %v773 = vld [vmem:[#allocation10 + $0x68] sm:$0xff]
    %v774 = vld [vmem:[#allocation10 + $0x70] sm:$0xff]
    %v775 = vld [vmem:[#allocation10 + $0x78] sm:$0xff]
    %v776 = vld [vmem:[%s10] sm:$0x1]
    %777 = vmatprep.subr.mxu0 0.0
    %778 = vmatpush1.msra.mxu0 %v760
    %779 = vmatprep.subr.mxu0 0.0
    %780 = vmatpush1.msra.mxu0 %v761
    %781 = vmatprep.subr.mxu0 0.0
    %782 = vmatpush1.msra.mxu0 %v762
    %783 = vmatprep.subr.mxu0 0.0
    %784 = vmatpush1.msra.mxu0 %v763
    %785 = vmatprep.subr.mxu0 0.0
    %786 = vmatpush1.msra.mxu0 %v764
    %787 = vmatprep.subr.mxu0 0.0
    %788 = vmatpush1.msra.mxu0 %v765
    %789 = vmatprep.subr.mxu0 0.0
    %790 = vmatpush1.msra.mxu0 %v766
    %791 = vmatprep.subr.mxu0 0.0
    %792 = vmatpush1.msra.mxu0 %v767
    %793 = vmatprep.subr.mxu0 0.0
    %794 = vmatpush1.msra.mxu0 %v768
    %795 = vmatprep.subr.mxu0 0.0
    %796 = vmatpush1.msra.mxu0 %v769
    %797 = vmatprep.subr.mxu0 0.0
    %798 = vmatpush1.msra.mxu0 %v770
    %799 = vmatprep.subr.mxu0 0.0
    %800 = vmatpush1.msra.mxu0 %v771
    %801 = vmatprep.subr.mxu0 0.0
    %802 = vmatpush1.msra.mxu0 %v772
    %803 = vmatprep.subr.mxu0 0.0
    %804 = vmatpush1.msra.mxu0 %v773
    %805 = vmatprep.subr.mxu0 0.0
    %806 = vmatpush1.msra.mxu0 %v774
    %807 = vmatprep.subr.mxu0 0.0
    %808 = vmatpush1.msra.mxu0 %v775
    %809 = vmatprep.subr.mxu0 0.0
    %810 = vmatpush1.msra.mxu0 0.0
    %811 = vmatprep.subr.mxu0 0.0
    %812 = vmatpush1.msra.mxu0 0.0
    %813 = vmatprep.subr.mxu0 0.0
    %814 = vmatpush1.msra.mxu0 0.0
    %815 = vmatprep.subr.mxu0 0.0
    %816 = vmatpush1.msra.mxu0 0.0
    %817 = vmatprep.subr.mxu0 0.0
    %818 = vmatpush1.msra.mxu0 0.0
    %819 = vmatprep.subr.mxu0 0.0
    %820 = vmatpush1.msra.mxu0 0.0
    %821 = vmatprep.subr.mxu0 0.0
    %822 = vmatpush1.msra.mxu0 0.0
    %823 = vmatprep.subr.mxu0 0.0
    %824 = vmatpush1.msra.mxu0 0.0
    %825 = vmatprep.subr.mxu0 0.0
    %826 = vmatpush1.msra.mxu0 0.0
    %827 = vmatprep.subr.mxu0 0.0
    %828 = vmatpush1.msra.mxu0 0.0
    %829 = vmatprep.subr.mxu0 0.0
    %830 = vmatpush1.msra.mxu0 0.0
    %831 = vmatprep.subr.mxu0 0.0
    %832 = vmatpush1.msra.mxu0 0.0
    %833 = vmatprep.subr.mxu0 0.0
    %834 = vmatpush1.msra.mxu0 0.0
    %835 = vmatprep.subr.mxu0 0.0
    %836 = vmatpush1.msra.mxu0 0.0
    %837 = vmatprep.subr.mxu0 0.0
    %838 = vmatpush1.msra.mxu0 0.0
    %839 = vmatprep.subr.mxu0 0.0
    %840 = vmatpush1.msra.mxu0 0.0
    %841 = vmatprep.mubr.f32.mxu0 0.0
    %842 = vmatmul.mubr.f32.gmra.mrb[0].mxu0 %v759
    %v843 = vpop.f32.mrb[0].mxu0
    %v844 = vadd.f32 %v776, %v843
    %v845 = vpop.f32.mrb[0].mxu0
    %846 = vdwg.mxu0
    %847 = vst [vmem:[#allocation11] sm:$0x1] %v844
    // Predicated region
    $region66: #{_lambda_.1} parent=1 // pred_check
      _
    $region67: #{_lambda_.1} parent=1 // pred_check_branch
      %849 = sbr.rel (0) target = $region69
    $region68: #{_lambda_.1} parent=1 // pred_region
      %s851 = ssub.s32 16, 16
      %852 = vsyncadd [#allocation4], %s851
      %s854 = sshll.u32 [#allocation11], 4
      %s855 = int_to_ptr.vmem [resolvable:$true] %s854
      %857 = dma.vmem_to_hbm [thread:$0]  %s855, 16, %s11, [#allocation4]
    $region69: #{_lambda_.1} parent=1 // pred_fallthru
      _
    // Predicated region
    $region70: #{_lambda_.1} parent=1 // pred_check
      _
    $region71: #{_lambda_.1} parent=1 // pred_check_branch
      %859 = sbr.rel (0) target = $region73
    $region72: #{_lambda_.1} parent=1 // pred_region
      %860 = dma.done [#allocation4], 16
    $region73: #{_lambda_.1} parent=1 // pred_fallthru
      _
    %861 = vsyncpa [#allocation3], 1
    %862 = vsyncpa [#allocation6], 1
    %863 = vsyncpa [#allocation9], 1
    %864 = vsyncpa [#allocation4], 1

</llo_original>
